<compile_context>
chip_gen: v7x
topology: tpu7x:2x2x1
jax: 0.10.0
libtpu: 0.0.40
codegen_flags: <defaults>
</compile_context>

<pallas_src>
import functools

import numpy as np

import jax
import jax.numpy as jnp
from jax.experimental import pallas as pl
from jax.experimental.pallas import tpu as pltpu


def _choose_time_tile(T, C, max_lanes=256):
    """Largest divisor of T with Tt*C <= max_lanes lanes, preferring multiples of 128."""
    cands = [t for t in range(1, T + 1) if T % t == 0 and t * C <= max_lanes]
    if not cands:
        return 1
    aligned = [t for t in cands if (t * C) % 128 == 0]
    return max(aligned) if aligned else max(cands)


def _banded_weight(w, time_tile, dilation):
    """(K, C_in, C_out) taps -> block-banded ((time_tile+pad)*C_in, time_tile*C_out) RHS.

    banded[r*Ci + ci, t*Co + co] = w[k, ci, co] iff r == t + k*dilation, else 0,
    so a single matmul against a (Bblk, (time_tile+pad)*Ci) slab of the padded
    signal produces the dilated 'same' convolution for a whole time tile.
    """
    K, Ci, Co = w.shape
    total_pad = dilation * (K - 1)
    R = time_tile + total_pad
    sel = np.zeros((K, R, time_tile), np.float32)
    for k in range(K):
        for t in range(time_tile):
            sel[k, t + k * dilation, t] = 1.0
    banded = jnp.einsum("krt,kio->rito", jnp.asarray(sel), w.astype(jnp.float32))
    return banded.reshape(R * Ci, time_tile * Co)


def _conv_block_fixup_kernel(scal_ref, x_ref, w1_ref, w2_ref, o_ref,
                             pad1_ref, pad2_ref, *,
                             BB, T, C, Tt, total_pad, L):
    """One grid step = Bblk independent (time, channel) sequences, lane-dense."""
    b1a = scal_ref[0]
    b1b = scal_ref[1]
    b2a = scal_ref[2]
    b2b = scal_ref[3]
    scale = scal_ref[4]

    TC = T * C
    TtC = Tt * C
    Wband = (Tt + total_pad) * C          # contraction width of the banded matmul
    lead = L * C                          # leading 'same'-padding halo (lanes)
    trail = (total_pad - L) * C           # trailing halo (lanes)
    n_tiles = T // Tt

    # Zero only the halo lanes of the padded scratch buffers; the interior lanes
    # are fully rewritten below.  Done every step (cheap: halo << interior) so
    # the kernel stays correct when the "parallel" grid is sharded across cores.
    if lead > 0:
        zl = jnp.zeros((BB, lead), jnp.float32)
        pad1_ref[:, pl.ds(0, lead)] = zl
        pad2_ref[:, pl.ds(0, lead)] = zl
    if trail > 0:
        zt = jnp.zeros((BB, trail), jnp.float32)
        pad1_ref[:, pl.ds(lead + TC, trail)] = zt
        pad2_ref[:, pl.ds(lead + TC, trail)] = zt

    # conv1 input: (x + bias1a) written lane-dense into the padded buffer.
    pad1_ref[:, pl.ds(lead, TC)] = x_ref[...].astype(jnp.float32) + b1a

    # conv1: one banded matmul per time tile -> relu -> stage conv2 input.
    for t in range(n_tiles):
        lhs = pad1_ref[:, pl.ds(t * TtC, Wband)]
        acc = jnp.dot(lhs, w1_ref[...], preferred_element_type=jnp.float32)
        h = jnp.maximum(acc + b1b, 0.0)
        pad2_ref[:, pl.ds(lead + t * TtC, TtC)] = h + b2a

    # conv2 -> fixup scale/bias -> residual -> relu, stored lane-dense.
    for t in range(n_tiles):
        lhs = pad2_ref[:, pl.ds(t * TtC, Wband)]
        acc = jnp.dot(lhs, w2_ref[...], preferred_element_type=jnp.float32)
        idn = x_ref[:, pl.ds(t * TtC, TtC)].astype(jnp.float32)
        out = acc * scale + b2b + idn
        o_ref[:, pl.ds(t * TtC, TtC)] = jnp.maximum(out, 0.0).astype(o_ref.dtype)


def conv_block_fixup(x, w1, w2, bias1a, bias1b, bias2a, bias2b, scale, *,
                     dilation, block_b=None):
    """x: (N, C, H, W) NCHW.  w1, w2: (K, C_in, C_out) (== torch weight[o,i,k,0].T)."""
    N, C, H, W = x.shape
    K, Ci, Co = w1.shape
    assert Ci == C and Co == C and w2.shape == (K, C, C), \
        "fixup residual requires input_filters == nb_filters"
    T = H
    total_pad = dilation * (K - 1)
    assert total_pad % 2 == 0, "use an odd filter_width so 'same' padding is symmetric"
    L = total_pad // 2
    TC = T * C
    B = N * W

    # (N, C, T, W) -> (B=N*W, T*C): one lane-dense row per (batch, sensor) sequence.
    x2 = jnp.transpose(x, (0, 3, 2, 1)).reshape(B, TC)

    Tt = _choose_time_tile(T, C)
    TtC = Tt * C
    Wband = (Tt + total_pad) * C
    Wflat = (T + total_pad) * C

    w1b = _banded_weight(w1, Tt, dilation)
    w2b = _banded_weight(w2, Tt, dilation)

    # Batch blocking: big contiguous per-step DMAs, M = Bblk for the MXU.
    if block_b is None:
        block_b = 128
    block_b = max(8, min(block_b, max(B, 8)))
    block_b -= block_b % 8
    nb = pl.cdiv(B, block_b)
    B_pad = nb * block_b
    if B_pad != B:
        x2 = jnp.pad(x2, ((0, B_pad - B), (0, 0)))

    scal = jnp.stack([bias1a, bias1b, bias2a, bias2b, scale]).astype(jnp.float32)

    kernel = functools.partial(_conv_block_fixup_kernel, BB=block_b, T=T, C=C,
                               Tt=Tt, total_pad=total_pad, L=L)

    # Raise the scoped VMEM limit only when the working set actually needs it
    # (keeps v5e's 16 MiB / v7x's 64 MiB defaults untouched for small tiles).
    est_bytes = 4 * (2 * 2 * block_b * TC        # x / out blocks, double-buffered
                     + 2 * block_b * Wflat       # padded conv scratches
                     + 2 * 2 * Wband * TtC)      # banded weights, double-buffered
    cparams = {"dimension_semantics": ("parallel",)}
    if est_bytes > 8 * 1024 * 1024:
        cparams["vmem_limit_bytes"] = min(int(est_bytes * 1.5) + (1 << 20),
                                          64 * 1024 * 1024)

    out2 = pl.pallas_call(
        kernel,
        out_shape=jax.ShapeDtypeStruct((B_pad, TC), x.dtype),
        grid_spec=pltpu.PrefetchScalarGridSpec(
            num_scalar_prefetch=0,
            grid=(nb,),
            in_specs=[
                pl.BlockSpec(memory_space=pltpu.MemorySpace.SMEM),   # fixup scalars
                pl.BlockSpec((block_b, TC), lambda b: (b, 0)),       # x slab (lane-dense)
                pl.BlockSpec((Wband, TtC), lambda b: (0, 0)),        # banded conv1 weights
                pl.BlockSpec((Wband, TtC), lambda b: (0, 0)),        # banded conv2 weights
            ],
            out_specs=pl.BlockSpec((block_b, TC), lambda b: (b, 0)),
            scratch_shapes=[
                pltpu.VMEM((block_b, Wflat), jnp.float32),   # zero-padded conv1 input
                pltpu.VMEM((block_b, Wflat), jnp.float32),   # zero-padded conv2 input
            ]),
        compiler_params=pltpu.CompilerParams(**cparams),
    )(scal, x2, w1b, w2b)

    out2 = out2[:B]
    return jnp.transpose(out2.reshape(N, W, T, C), (0, 3, 2, 1))


def ref_forward(x, w1, w2, b1a, b1b, b2a, b2b, scale, dilation):
    """Pure-JAX reference matching the PyTorch ConvBlockFixup forward (NCHW, 'same')."""
    def conv(inp, w):
        K = w.shape[0]
        total = dilation * (K - 1)
        lo = total // 2
        wt = jnp.transpose(w, (2, 1, 0))[..., None]   # (C_out, C_in, K, 1) == OIHW
        return jax.lax.conv_general_dilated(
            inp, wt, window_strides=(1, 1),
            padding=[(lo, total - lo), (0, 0)],
            rhs_dilation=(dilation, 1),
            dimension_numbers=("NCHW", "OIHW", "NCHW"))

    out = conv(x + b1a, w1)
    out = jnp.maximum(out + b1b, 0.0)
    out = conv(out + b2a, w2)
    out = out * scale + b2b
    out = out + x
    return jnp.maximum(out, 0.0)


if __name__ == "__main__":
    key = jax.random.PRNGKey(0)
    # Small shapes: N=4, input_filters = nb_filters = 8 (residual needs equal),
    # H (time/window) = 16, W (sensor channels) = 8, filter_width = 5, dilation = 2.
    N, C, H, W = 4, 8, 16, 8
    filter_width, dilation = 5, 2

    k1, k2, k3 = jax.random.split(key, 3)
    x = jax.random.normal(k1, (N, C, H, W), jnp.float32)
    fan_in = C * filter_width
    w1 = jax.random.normal(k2, (filter_width, C, C), jnp.float32) / jnp.sqrt(fan_in)
    w2 = jax.random.normal(k3, (filter_width, C, C), jnp.float32) / jnp.sqrt(fan_in)

    # Module __init__ sets biases=0 and scale=1; use deterministic nonzero
    # values so every term of the fixup forward is actually exercised.
    bias1a = jnp.float32(0.10)
    bias1b = jnp.float32(-0.05)
    bias2a = jnp.float32(0.02)
    bias2b = jnp.float32(0.03)
    scale = jnp.float32(1.25)

    # block_b=16 -> grid of 2 batch blocks (B = N*W = 32 sequences).
    out = conv_block_fixup(x, w1, w2, bias1a, bias1b, bias2a, bias2b, scale,
                           dilation=dilation, block_b=16)
    out = jax.block_until_ready(out)

    ref = ref_forward(x, w1, w2, bias1a, bias1b, bias2a, bias2b, scale, dilation)
    assert out.shape == x.shape and out.dtype == x.dtype
    max_err = float(jnp.max(jnp.abs(out - ref)))
    assert jnp.allclose(out, ref, atol=1e-4, rtol=1e-4), f"max_err={max_err}"
    print("KERNEL_OK")
</pallas_src>

<mosaic_0001>
module attributes {stable_mosaic.version = 11 : i64} {
  func.func @_conv_block_fixup_kernel(%arg0: i32, %arg1: memref<5xf32, #tpu.memory_space<smem>>, %arg2: memref<16x128xf32, #tpu.memory_space<vmem>>, %arg3: memref<192x128xf32, #tpu.memory_space<vmem>>, %arg4: memref<192x128xf32, #tpu.memory_space<vmem>>, %arg5: memref<16x128xf32, #tpu.memory_space<vmem>>, %arg6: memref<16x192xf32, #tpu.memory_space<vmem>>, %arg7: memref<16x192xf32, #tpu.memory_space<vmem>>) attributes {dimension_semantics = [#tpu.dimension_semantics<parallel>], iteration_bounds = array<i64: 2>, scalar_prefetch = 0 : i64, scratch_operands = 2 : i64, tpu.core_type = #tpu.core_type<tc>, window_params = [{transform_indices = @transform_0, window_bounds = array<i64: 5>}, {transform_indices = @transform_1, window_bounds = array<i64: 16, 128>}, {pipeline_mode = #tpu.pipeline_mode<synchronous>, transform_indices = @transform_2, window_bounds = array<i64: 192, 128>}, {pipeline_mode = #tpu.pipeline_mode<synchronous>, transform_indices = @transform_3, window_bounds = array<i64: 192, 128>}, {transform_indices = @transform_4, window_bounds = array<i64: 16, 128>}]} {
    %c0 = arith.constant 0 : index
    %0 = memref.load %arg1[%c0] : memref<5xf32, #tpu.memory_space<smem>>
    %c1 = arith.constant 1 : index
    %1 = memref.load %arg1[%c1] : memref<5xf32, #tpu.memory_space<smem>>
    %c2 = arith.constant 2 : index
    %2 = memref.load %arg1[%c2] : memref<5xf32, #tpu.memory_space<smem>>
    %c3 = arith.constant 3 : index
    %3 = memref.load %arg1[%c3] : memref<5xf32, #tpu.memory_space<smem>>
    %c4 = arith.constant 4 : index
    %4 = memref.load %arg1[%c4] : memref<5xf32, #tpu.memory_space<smem>>
    %cst = arith.constant 0.000000e+00 : f32
    %5 = vector.broadcast %cst : f32 to vector<16x32xf32>
    %c0_0 = arith.constant 0 : index
    %c0_1 = arith.constant 0 : index
    %6 = vector.load %arg6[%c0_0, %c0_1] : memref<16x192xf32, #tpu.memory_space<vmem>>, vector<16x32xf32>
    tpu.vector_store %arg6[%c0_0, %c0_1], %5 {strides = array<i32>} : memref<16x192xf32, #tpu.memory_space<vmem>>, vector<16x32xf32>,
    %c0_2 = arith.constant 0 : index
    %c0_3 = arith.constant 0 : index
    %7 = vector.load %arg7[%c0_2, %c0_3] : memref<16x192xf32, #tpu.memory_space<vmem>>, vector<16x32xf32>
    tpu.vector_store %arg7[%c0_2, %c0_3], %5 {strides = array<i32>} : memref<16x192xf32, #tpu.memory_space<vmem>>, vector<16x32xf32>,
    %cst_4 = arith.constant 0.000000e+00 : f32
    %8 = vector.broadcast %cst_4 : f32 to vector<16x32xf32>
    %c0_5 = arith.constant 0 : index
    %c160 = arith.constant 160 : index
    %9 = vector.load %arg6[%c0_5, %c160] : memref<16x192xf32, #tpu.memory_space<vmem>>, vector<16x32xf32>
    tpu.vector_store %arg6[%c0_5, %c160], %8 {strides = array<i32>} : memref<16x192xf32, #tpu.memory_space<vmem>>, vector<16x32xf32>,
    %c0_6 = arith.constant 0 : index
    %c160_7 = arith.constant 160 : index
    %10 = vector.load %arg7[%c0_6, %c160_7] : memref<16x192xf32, #tpu.memory_space<vmem>>, vector<16x32xf32>
    tpu.vector_store %arg7[%c0_6, %c160_7], %8 {strides = array<i32>} : memref<16x192xf32, #tpu.memory_space<vmem>>, vector<16x32xf32>,
    %c0_8 = arith.constant 0 : index
    %c0_9 = arith.constant 0 : index
    %11 = vector.load %arg2[%c0_8, %c0_9] : memref<16x128xf32, #tpu.memory_space<vmem>>, vector<16x128xf32>
    %12 = vector.broadcast %0 : f32 to vector<16x128xf32>
    %13 = arith.addf %11, %12 : vector<16x128xf32>
    %c0_10 = arith.constant 0 : index
    %c32 = arith.constant 32 : index
    %14 = vector.load %arg6[%c0_10, %c32] : memref<16x192xf32, #tpu.memory_space<vmem>>, vector<16x128xf32>
    tpu.vector_store %arg6[%c0_10, %c32], %13 {strides = array<i32>} : memref<16x192xf32, #tpu.memory_space<vmem>>, vector<16x128xf32>,
    %c0_11 = arith.constant 0 : index
    %c0_12 = arith.constant 0 : index
    %15 = vector.load %arg6[%c0_11, %c0_12] : memref<16x192xf32, #tpu.memory_space<vmem>>, vector<16x192xf32>
    %c0_13 = arith.constant 0 : index
    %c0_14 = arith.constant 0 : index
    %16 = vector.load %arg3[%c0_13, %c0_14] : memref<192x128xf32, #tpu.memory_space<vmem>>, vector<192x128xf32>
    %cst_15 = arith.constant dense<0.000000e+00> : vector<16x128xf32>
    %17 = tpu.matmul %15, %16, %cst_15 {dimension_numbers = #tpu.dot_dimension_numbers<[1], [0], [0], [1], [0, 0, 1, 1], [], []>} : vector<16x192xf32>, vector<192x128xf32>, vector<16x128xf32> -> vector<16x128xf32>
    %18 = vector.broadcast %1 : f32 to vector<16x128xf32>
    %19 = arith.addf %17, %18 : vector<16x128xf32>
    %cst_16 = arith.constant 0.000000e+00 : f32
    %20 = vector.broadcast %cst_16 : f32 to vector<16x128xf32>
    %21 = arith.maximumf %19, %20 : vector<16x128xf32>
    %22 = vector.broadcast %2 : f32 to vector<16x128xf32>
    %23 = arith.addf %21, %22 : vector<16x128xf32>
    %c0_17 = arith.constant 0 : index
    %c32_18 = arith.constant 32 : index
    %24 = vector.load %arg7[%c0_17, %c32_18] : memref<16x192xf32, #tpu.memory_space<vmem>>, vector<16x128xf32>
    tpu.vector_store %arg7[%c0_17, %c32_18], %23 {strides = array<i32>} : memref<16x192xf32, #tpu.memory_space<vmem>>, vector<16x128xf32>,
    %c0_19 = arith.constant 0 : index
    %c0_20 = arith.constant 0 : index
    %25 = vector.load %arg7[%c0_19, %c0_20] : memref<16x192xf32, #tpu.memory_space<vmem>>, vector<16x192xf32>
    %c0_21 = arith.constant 0 : index
    %c0_22 = arith.constant 0 : index
    %26 = vector.load %arg4[%c0_21, %c0_22] : memref<192x128xf32, #tpu.memory_space<vmem>>, vector<192x128xf32>
    %cst_23 = arith.constant dense<0.000000e+00> : vector<16x128xf32>
    %27 = tpu.matmul %25, %26, %cst_23 {dimension_numbers = #tpu.dot_dimension_numbers<[1], [0], [0], [1], [0, 0, 1, 1], [], []>} : vector<16x192xf32>, vector<192x128xf32>, vector<16x128xf32> -> vector<16x128xf32>
    %c0_24 = arith.constant 0 : index
    %c0_25 = arith.constant 0 : index
    %28 = vector.load %arg2[%c0_24, %c0_25] : memref<16x128xf32, #tpu.memory_space<vmem>>, vector<16x128xf32>
    %29 = vector.broadcast %4 : f32 to vector<16x128xf32>
    %30 = arith.mulf %27, %29 : vector<16x128xf32>
    %31 = vector.broadcast %3 : f32 to vector<16x128xf32>
    %32 = arith.addf %30, %31 : vector<16x128xf32>
    %33 = arith.addf %32, %28 : vector<16x128xf32>
    %cst_26 = arith.constant 0.000000e+00 : f32
    %34 = vector.broadcast %cst_26 : f32 to vector<16x128xf32>
    %35 = arith.maximumf %33, %34 : vector<16x128xf32>
    %c0_27 = arith.constant 0 : index
    %c0_28 = arith.constant 0 : index
    %36 = vector.load %arg5[%c0_27, %c0_28] : memref<16x128xf32, #tpu.memory_space<vmem>>, vector<16x128xf32>
    tpu.vector_store %arg5[%c0_27, %c0_28], %35 {strides = array<i32>} : memref<16x128xf32, #tpu.memory_space<vmem>>, vector<16x128xf32>,
    return
  }
  func.func @transform_0(%arg0: i32) -> i32 {
    %c0_i32 = arith.constant 0 : i32
    %c0_i32_0 = arith.constant 0 : i32
    return %c0_i32 : i32
  }
  func.func @transform_1(%arg0: i32) -> (i32, i32) {
    %c0_i32 = arith.constant 0 : i32
    %c0_i32_0 = arith.constant 0 : i32
    return %arg0, %c0_i32 : i32, i32
  }
  func.func @transform_2(%arg0: i32) -> (i32, i32) {
    %c0_i32 = arith.constant 0 : i32
    %c0_i32_0 = arith.constant 0 : i32
    %c0_i32_1 = arith.constant 0 : i32
    return %c0_i32, %c0_i32_0 : i32, i32
  }
  func.func @transform_3(%arg0: i32) -> (i32, i32) {
    %c0_i32 = arith.constant 0 : i32
    %c0_i32_0 = arith.constant 0 : i32
    %c0_i32_1 = arith.constant 0 : i32
    return %c0_i32, %c0_i32_0 : i32, i32
  }
  func.func @transform_4(%arg0: i32) -> (i32, i32) {
    %c0_i32 = arith.constant 0 : i32
    %c0_i32_0 = arith.constant 0 : i32
    return %arg0, %c0_i32 : i32, i32
  }
}

</mosaic_0001>

<llo_original>
// kernel: tpu_custom_call.1
$region0: #{tpu_custom_call.1}
  #allocation0 [shape = 'u32[]', space=smem, size = 0x4, offset = 0x4, fixed_abs, tag = 'smem constant byte address 0x4 - core index']
  #allocation1 [shape = 'u32[144,128]{1,0:T(1,128)}', space=vmem, size = 0x12000, scoped, tag = 'internal scratch']
  #allocation2 [shape = 'f32[16,192]{1,0:T(8,128)}', space=vmem, size = 0x4000, scoped, tag = 'scratch operand']
  #allocation3 [shape = 'f32[16,192]{1,0:T(8,128)}', space=vmem, size = 0x4000, scoped, tag = 'scratch operand']
  %s0 = inlined_call_operand.hbm [shape: f32[5], index: 0, kind: input, shape index: {}]
  %s1 = inlined_call_operand.hbm [shape: f32[32,128], index: 1, kind: input, shape index: {}]
  %s2 = inlined_call_operand.hbm [shape: f32[192,128], index: 2, kind: input, shape index: {}]
  %s3 = inlined_call_operand.hbm [shape: f32[192,128], index: 3, kind: input, shape index: {}]
  %s4 = inlined_call_operand.hbm [shape: f32[32,128], index: 4, kind: output, shape index: {}]
  %s5 = sld [smem:[#allocation0]]
  $region65: #{tpu_custom_call.1} parent=0
    _
  %s7 = ssub.s32 1, %s5
  %s8 = scalar_select 0, %s7, %s5
  $region1: #{tpu_custom_call.1} parent=0
    #allocation4 [shape = 'u8[512]{0}', space=smem, size = 0x200, scoped, tag = 'input window, operand 0, single buffered']
    #allocation5 [shape = 's32[2]{0}', space=sflag, size = 0x8, scoped, tag = 'scoped memory for tpu_custom_call.1']
    #allocation6 [shape = 's32[2]{0}', space=sflag, size = 0x8, scoped, tag = 'scoped memory for tpu_custom_call.1']
    #allocation7 [shape = 's32[2]{0}', space=sflag, size = 0x8, scoped, tag = 'scoped memory for tpu_custom_call.1']
    #allocation8 [shape = 'u8[16384]{0}', space=vmem, size = 0x4000, scoped, tag = 'input window, operand 1']
    #allocation9 [shape = 'u8[98304]{0}', space=vmem, size = 0x18000, scoped, tag = 'input window, operand 2, single buffered']
    #allocation10 [shape = 's32[1]{0}', space=sflag, size = 0x4, scoped, tag = 'scoped memory for tpu_custom_call.1']
    #allocation11 [shape = 'u8[98304]{0}', space=vmem, size = 0x18000, scoped, tag = 'input window, operand 3, single buffered']
    #allocation12 [shape = 'u8[16384]{0}', space=vmem, size = 0x4000, scoped, tag = 'output window, operand 0']
    %9 = vsyncpa [#allocation7], 0
    %10 = vsyncpa [#allocation5], 0
    %s11 = scalar_lea.sflag [#allocation5], 1
    %12 = vsyncpa %s11, 0
    %13 = vsyncpa [#allocation10], 0
    %14 = vsyncpa [#allocation6], 0
    %s15 = scalar_lea.sflag [#allocation6], 1
    %16 = vsyncpa %s15, 0
    loop: start=0, step=1, limit=4
    $region2: #{tpu_custom_call.1} parent=1 // loop_pre_header
      _
    $region3: #{tpu_custom_call.1} parent=1 // loop_header
      %s18 = sphi 0, %s22
      %p19 = scmp.ge.s32.totalorder %s18, 4
      %s26 = sphi 0, %s26
      %s28 = sphi 0, %s26
      %s29 = sphi 0, %s28
      %s43 = sphi 0, %s29
      %s49 = sphi 0, %s51
      %s52 = sphi 0, %s49
      %s53 = sphi 0, %s52
      %s69 = sphi 0, %s53
      %s73 = sphi 0, %s73
      %s75 = sphi 0, %s73
      %s76 = sphi 0, %s75
      %s90 = sphi 0, %s76
      %s94 = sphi 0, %s94
      %s96 = sphi 0, %s94
      %s97 = sphi 0, %s96
      %s111 = sphi 0, %s97
      %s117 = sphi 0, %s119
      %s120 = sphi 0, %s117
      %s121 = sphi 0, %s120
      %s137 = sphi 0, %s121
    $region4: #{tpu_custom_call.1} parent=1 // loop_header_branch
      %21 = sbr.rel (%p19) target = $region8
    $region5: #{tpu_custom_call.1} parent=1 // loop_body
      %s23 = ssub.s32 %s18, 1
      %s24 = ssub.s32 %s18, 2
      %s25 = sadd.s32 %s18, 1
      %s27 = sadd.s32 %s26, 1
      %p30 = scmp.eq.s32.totalorder %s18, 1
      %p31 = scmp.ne.s32.totalorder %s26, %s28
      %p32 = scmp.eq.s32.totalorder %s18, 0
      %p33 = por %p31, %p32
      %p34 = scmp.ne.s32.totalorder %s26, %s28
      %p35 = scmp.eq.s32.totalorder %s23, 1
      %p36 = por %p34, %p35
      %p37 = scmp.ne.s32.totalorder %s28, %s29
      %p38 = scmp.eq.s32.totalorder %s23, 0
      %p39 = por %p37, %p38
      %p40 = scmp.ne.s32.totalorder %s28, %s29
      %p41 = scmp.eq.s32.totalorder %s24, 1
      %p42 = por %p40, %p41
      %p44 = scmp.ne.s32.totalorder %s29, %s43
      %p45 = scmp.eq.s32.totalorder %s24, 0
      %p46 = por %p44, %p45
      %s47 = ssub.s32 %s18, %s25
      %p48 = scmp.eq.s32.totalorder %s47, 0
      %s50 = sadd.s32 %s49, 1
      %s51 = scalar_select %p48, %s49, %s50
      %p54 = pneg %p48
      %p55 = scmp.eq.s32.totalorder %s18, 1
      %p56 = por %p54, %p55
      %p57 = scmp.ne.s32.totalorder %s49, %s52
      %p58 = scmp.eq.s32.totalorder %s18, 0
      %p59 = por %p57, %p58
      %p60 = scmp.ne.s32.totalorder %s49, %s52
      %p61 = scmp.eq.s32.totalorder %s23, 1
      %p62 = por %p60, %p61
      %p63 = scmp.ne.s32.totalorder %s52, %s53
      %p64 = scmp.eq.s32.totalorder %s23, 0
      %p65 = por %p63, %p64
      %p66 = scmp.ne.s32.totalorder %s52, %s53
      %p67 = scmp.eq.s32.totalorder %s24, 1
      %p68 = por %p66, %p67
      %p70 = scmp.ne.s32.totalorder %s53, %s69
      %p71 = scmp.eq.s32.totalorder %s24, 0
      %p72 = por %p70, %p71
      %s74 = sadd.s32 %s73, 1
      %p77 = scmp.eq.s32.totalorder %s18, 1
      %p78 = scmp.ne.s32.totalorder %s73, %s75
      %p79 = scmp.eq.s32.totalorder %s18, 0
      %p80 = por %p78, %p79
      %p81 = scmp.ne.s32.totalorder %s73, %s75
      %p82 = scmp.eq.s32.totalorder %s23, 1
      %p83 = por %p81, %p82
      %p84 = scmp.ne.s32.totalorder %s75, %s76
      %p85 = scmp.eq.s32.totalorder %s23, 0
      %p86 = por %p84, %p85
      %p87 = scmp.ne.s32.totalorder %s75, %s76
      %p88 = scmp.eq.s32.totalorder %s24, 1
      %p89 = por %p87, %p88
      %p91 = scmp.ne.s32.totalorder %s76, %s90
      %p92 = scmp.eq.s32.totalorder %s24, 0
      %p93 = por %p91, %p92
      %s95 = sadd.s32 %s94, 1
      %p98 = scmp.eq.s32.totalorder %s18, 1
      %p99 = scmp.ne.s32.totalorder %s94, %s96
      %p100 = scmp.eq.s32.totalorder %s18, 0
      %p101 = por %p99, %p100
      %p102 = scmp.ne.s32.totalorder %s94, %s96
      %p103 = scmp.eq.s32.totalorder %s23, 1
      %p104 = por %p102, %p103
      %p105 = scmp.ne.s32.totalorder %s96, %s97
      %p106 = scmp.eq.s32.totalorder %s23, 0
      %p107 = por %p105, %p106
      %p108 = scmp.ne.s32.totalorder %s96, %s97
      %p109 = scmp.eq.s32.totalorder %s24, 1
      %p110 = por %p108, %p109
      %p112 = scmp.ne.s32.totalorder %s97, %s111
      %p113 = scmp.eq.s32.totalorder %s24, 0
      %p114 = por %p112, %p113
      %s115 = ssub.s32 %s18, %s25
      %p116 = scmp.eq.s32.totalorder %s115, 0
      %s118 = sadd.s32 %s117, 1
      %s119 = scalar_select %p116, %s117, %s118
      %p122 = pneg %p116
      %p123 = scmp.eq.s32.totalorder %s18, 1
      %p124 = por %p122, %p123
      %p125 = scmp.ne.s32.totalorder %s117, %s120
      %p126 = scmp.eq.s32.totalorder %s18, 0
      %p127 = por %p125, %p126
      %p128 = scmp.ne.s32.totalorder %s117, %s120
      %p129 = scmp.eq.s32.totalorder %s23, 1
      %p130 = por %p128, %p129
      %p131 = scmp.ne.s32.totalorder %s120, %s121
      %p132 = scmp.eq.s32.totalorder %s23, 0
      %p133 = por %p131, %p132
      %p134 = scmp.ne.s32.totalorder %s120, %s121
      %p135 = scmp.eq.s32.totalorder %s24, 1
      %p136 = por %p134, %p135
      %p138 = scmp.ne.s32.totalorder %s121, %s137
      %p139 = scmp.eq.s32.totalorder %s24, 0
      %p140 = por %p138, %p139
      %p141 = scmp.le.s32.totalorder 1, %s18
      %p142 = scmp.lt.s32.totalorder %s18, 3
      %p143 = pnand %p141, %p142
      %p144 = pneg %p143
      // Predicated region
      $region9: #{tpu_custom_call.1} parent=5 // pred_check
        _
      $region10: #{tpu_custom_call.1} parent=5 // pred_check_branch
        %146 = sbr.rel (%p143) target = $region12
      $region11: #{tpu_custom_call.1} parent=5 // pred_region
        %s147 = ssub.s32 %s18, 1
        // Predicated region
        $region13: #{tpu_custom_call.1} parent=11 // pred_check
          %p148 = pneg %p39
        $region14: #{tpu_custom_call.1} parent=11 // pred_check_branch
          %150 = sbr.rel (%p148) target = $region16
        $region15: #{tpu_custom_call.1} parent=11 // pred_region
          %s152 = ssub.s32 16, 16
          %153 = vsyncadd [#allocation7], %s152
          %156 = dma.hbm_to_smem %s0, 16, [#allocation4], [#allocation7]
        $region16: #{tpu_custom_call.1} parent=11 // pred_fallthru
          _
        // Predicated region
        $region17: #{tpu_custom_call.1} parent=11 // pred_check
          %p157 = pneg %p86
        $region18: #{tpu_custom_call.1} parent=11 // pred_check_branch
          %159 = sbr.rel (%p157) target = $region20
        $region19: #{tpu_custom_call.1} parent=11 // pred_region
          %s161 = ssub.s32 3072, 3072
          %162 = vsyncadd [#allocation10], %s161
          %s163 = sshll.u32 [#allocation9], 4
          %s164 = int_to_ptr.vmem [resolvable:$true] %s163
          %169 = dma.hbm_to_vmem [thread:$0]  %s2, 3072, %s164, [#allocation10], 128, 128, 8
        $region20: #{tpu_custom_call.1} parent=11 // pred_fallthru
          _
        // Predicated region
        $region21: #{tpu_custom_call.1} parent=11 // pred_check
          %p170 = pneg %p107
        $region22: #{tpu_custom_call.1} parent=11 // pred_check_branch
          %172 = sbr.rel (%p170) target = $region24
        $region23: #{tpu_custom_call.1} parent=11 // pred_region
          %s174 = ssub.s32 3072, 3072
          %175 = vsyncadd [#allocation10], %s174
          %s176 = sshll.u32 [#allocation11], 4
          %s177 = int_to_ptr.vmem [resolvable:$true] %s176
          %182 = dma.hbm_to_vmem [thread:$0]  %s3, 3072, %s177, [#allocation10], 128, 128, 8
        $region24: #{tpu_custom_call.1} parent=11 // pred_fallthru
          _
      $region12: #{tpu_custom_call.1} parent=5 // pred_fallthru
        _
      %p183 = scmp.lt.s32.totalorder %s18, 2
      // Predicated region
      $region25: #{tpu_custom_call.1} parent=5 // pred_check
        %p184 = pneg %p183
      $region26: #{tpu_custom_call.1} parent=5 // pred_check_branch
        %186 = sbr.rel (%p184) target = $region28
      $region27: #{tpu_custom_call.1} parent=5 // pred_region
        // Predicated region
        $region29: #{tpu_custom_call.1} parent=27 // pred_check
          %p187 = pneg %p59
        $region30: #{tpu_custom_call.1} parent=27 // pred_check_branch
          %189 = sbr.rel (%p187) target = $region32
        $region31: #{tpu_custom_call.1} parent=27 // pred_region
          %s190 = sand.u32 %s49, 1
          %s191 = scalar_lea.sflag [#allocation5], %s190
          %s192 = sand.u32 %s49, 1
          %s193 = smul.addr %s192, 16
          %s194 = scalar_lea.vmem [#allocation8], %s193
          %s195 = smul.u32 2, %s18
          %s197 = ssub.s32 256, 256
          %198 = vsyncadd %s191, %s197
          %s199 = smul.addr %s195, 128
          %s200 = scalar_lea.hbm %s1, %s199
          %s201 = sshll.u32 %s194, 4
          %s202 = int_to_ptr.vmem [resolvable:$true] %s201
          %207 = dma.hbm_to_vmem [thread:$0]  %s200, 256, %s202, %s191, 128, 128, 8
        $region32: #{tpu_custom_call.1} parent=27 // pred_fallthru
          _
      $region28: #{tpu_custom_call.1} parent=5 // pred_fallthru
        _
      %p208 = scmp.le.s32.totalorder 1, %s18
      %p209 = scmp.lt.s32.totalorder %s18, 3
      %p210 = pnand %p208, %p209
      %p211 = pneg %p210
      // Predicated region
      $region33: #{tpu_custom_call.1} parent=5 // pred_check
        _
      $region34: #{tpu_custom_call.1} parent=5 // pred_check_branch
        %213 = sbr.rel (%p210) target = $region36
      $region35: #{tpu_custom_call.1} parent=5 // pred_region
        %s214 = ssub.s32 %s18, 1
        // Predicated region
        $region37: #{tpu_custom_call.1} parent=35 // pred_check
          %p215 = pneg %p39
        $region38: #{tpu_custom_call.1} parent=35 // pred_check_branch
          %217 = sbr.rel (%p215) target = $region40
        $region39: #{tpu_custom_call.1} parent=35 // pred_region
          %218 = dma.done [#allocation7], 16
        $region40: #{tpu_custom_call.1} parent=35 // pred_fallthru
          _
        %s219 = sand.u32 %s52, 1
        %s220 = scalar_lea.sflag [#allocation5], %s219
        %s221 = sand.u32 %s52, 1
        %s222 = smul.addr %s221, 16
        %s223 = scalar_lea.vmem [#allocation8], %s222
        // Predicated region
        $region41: #{tpu_custom_call.1} parent=35 // pred_check
          %p224 = pneg %p65
        $region42: #{tpu_custom_call.1} parent=35 // pred_check_branch
          %226 = sbr.rel (%p224) target = $region44
        $region43: #{tpu_custom_call.1} parent=35 // pred_region
          %227 = dma.done %s220, 256
        $region44: #{tpu_custom_call.1} parent=35 // pred_fallthru
          _
        // Predicated region
        $region45: #{tpu_custom_call.1} parent=35 // pred_check
          %p228 = pneg %p86
        $region46: #{tpu_custom_call.1} parent=35 // pred_check_branch
          %230 = sbr.rel (%p228) target = $region48
        $region47: #{tpu_custom_call.1} parent=35 // pred_region
          %231 = dma.done [#allocation10], 3072
        $region48: #{tpu_custom_call.1} parent=35 // pred_fallthru
          _
        // Predicated region
        $region49: #{tpu_custom_call.1} parent=35 // pred_check
          %p232 = pneg %p107
        $region50: #{tpu_custom_call.1} parent=35 // pred_check_branch
          %234 = sbr.rel (%p232) target = $region52
        $region51: #{tpu_custom_call.1} parent=35 // pred_region
          %235 = dma.done [#allocation10], 3072
        $region52: #{tpu_custom_call.1} parent=35 // pred_fallthru
          _
        %236 = sfence
        %p237 = pneg %p39
        %p238 = pneg %p36
        %s239 = sand.u32 %s52, 1
        %s240 = scalar_lea.sflag [#allocation5], %s239
        %s241 = sand.u32 %s52, 1
        %s242 = smul.addr %s241, 16
        %s243 = scalar_lea.vmem [#allocation8], %s242
        %p244 = pneg %p65
        %p245 = pneg %p62
        %p246 = pneg %p86
        %p247 = pneg %p83
        %p248 = pneg %p107
        %p249 = pneg %p104
        %p250 = pneg %p133
        %p251 = pneg %p130
        %s252 = sand.u32 %s120, 1
        %s253 = scalar_lea.sflag [#allocation6], %s252
        %s254 = sand.u32 %s120, 1
        %s255 = smul.addr %s254, 16
        %s256 = scalar_lea.vmem [#allocation12], %s255
        %s257 = smul.u32 2, %s23
        %s258 = smul.u32 2, %s23
        %s259 = sld [smem:[#allocation4]]
        %s260 = sld [smem:[#allocation4 + $0x1]]
        %s261 = sld [smem:[#allocation4 + $0x2]]
        %s262 = sld [smem:[#allocation4 + $0x3]]
        %s263 = sld [smem:[#allocation4 + $0x4]]
        %vm264 = vcmask 261120
        %265 = vst.msk [vmem:[#allocation2] sm:$0xff] %vm264, 0.0
        %266 = vst.msk [vmem:[#allocation2 + $0x10] sm:$0xff] %vm264, 0.0
        %267 = vst.msk [vmem:[#allocation3] sm:$0xff] %vm264, 0.0
        %268 = vst.msk [vmem:[#allocation3 + $0x10] sm:$0xff] %vm264, 0.0
        %vm269 = vcmask 523520
        %270 = vst.msk [vmem:[#allocation2 + $0x8] sm:$0xff] %vm269, 0.0
        %271 = vst.msk [vmem:[#allocation2 + $0x18] sm:$0xff] %vm269, 0.0
        %272 = vst.msk [vmem:[#allocation3 + $0x8] sm:$0xff] %vm269, 0.0
        %273 = vst.msk [vmem:[#allocation3 + $0x18] sm:$0xff] %vm269, 0.0
        %v274 = vld [vmem:[%s223] sm:$0xff]
        %v275 = vld [vmem:[%s223 + $0x8] sm:$0xff]
        %v276 = vstv %s259
        %v277 = vadd.f32 %v274, %v276
        %v278 = vadd.f32 %v275, %v276
        %281 = vrot.lane.b32.xlu0 %v277, 32
        %v282 = vpop.permute.xlu0 %281
        %283 = vrot.lane.b32.xlu0 %v278, 32
        %v284 = vpop.permute.xlu0 %283
        %vm287 = vcmask 1047808
        %288 = vst.msk [vmem:[#allocation2] sm:$0xff] %vm287, %v282
        %289 = vst.msk [vmem:[#allocation2 + $0x8] sm:$0xff] %vm264, %v282
        %290 = vst.msk [vmem:[#allocation2 + $0x10] sm:$0xff] %vm287, %v284
        %291 = vst.msk [vmem:[#allocation2 + $0x18] sm:$0xff] %vm264, %v284
        %v292 = vld [vmem:[#allocation2] sm:$0xff]
        %v293 = vld [vmem:[#allocation2 + $0x8] sm:$0xff]
        %v294 = vld [vmem:[#allocation2 + $0x10] sm:$0xff]
        %v295 = vld [vmem:[#allocation2 + $0x18] sm:$0xff]
        %v296 = vld [vmem:[#allocation9] sm:$0xff]
        %v297 = vld [vmem:[#allocation9 + $0x8] sm:$0xff]
        %v298 = vld [vmem:[#allocation9 + $0x10] sm:$0xff]
        %v299 = vld [vmem:[#allocation9 + $0x18] sm:$0xff]
        %v300 = vld [vmem:[#allocation9 + $0x20] sm:$0xff]
        %v301 = vld [vmem:[#allocation9 + $0x28] sm:$0xff]
        %v302 = vld [vmem:[#allocation9 + $0x30] sm:$0xff]
        %v303 = vld [vmem:[#allocation9 + $0x38] sm:$0xff]
        %v304 = vld [vmem:[#allocation9 + $0x40] sm:$0xff]
        %v305 = vld [vmem:[#allocation9 + $0x48] sm:$0xff]
        %v306 = vld [vmem:[#allocation9 + $0x50] sm:$0xff]
        %v307 = vld [vmem:[#allocation9 + $0x58] sm:$0xff]
        %v308 = vld [vmem:[#allocation9 + $0x60] sm:$0xff]
        %v309 = vld [vmem:[#allocation9 + $0x68] sm:$0xff]
        %v310 = vld [vmem:[#allocation9 + $0x70] sm:$0xff]
        %v311 = vld [vmem:[#allocation9 + $0x78] sm:$0xff]
        %v312 = vld [vmem:[#allocation9 + $0x80] sm:$0xff]
        %v313 = vld [vmem:[#allocation9 + $0x88] sm:$0xff]
        %v314 = vld [vmem:[#allocation9 + $0x90] sm:$0xff]
        %v315 = vld [vmem:[#allocation9 + $0x98] sm:$0xff]
        %v316 = vld [vmem:[#allocation9 + $0xa0] sm:$0xff]
        %v317 = vld [vmem:[#allocation9 + $0xa8] sm:$0xff]
        %v318 = vld [vmem:[#allocation9 + $0xb0] sm:$0xff]
        %v319 = vld [vmem:[#allocation9 + $0xb8] sm:$0xff]
        %v320 = vstv %s260
        %vm321 = vcmask 523264
        %v323 = vsel %vm321, %v293, 0
        %v326 = vsel %vm321, %v295, 0
        %328 = vmatprep.subr.mxu0 0.0
        %329 = vmatpush1.msra.mxu0 %v296
        %330 = vmatprep.subr.mxu0 0.0
        %331 = vmatpush1.msra.mxu0 %v297
        %332 = vmatprep.subr.mxu0 0.0
        %333 = vmatpush1.msra.mxu0 %v298
        %334 = vmatprep.subr.mxu0 0.0
        %335 = vmatpush1.msra.mxu0 %v299
        %336 = vmatprep.subr.mxu0 0.0
        %337 = vmatpush1.msra.mxu0 %v300
        %338 = vmatprep.subr.mxu0 0.0
        %339 = vmatpush1.msra.mxu0 %v301
        %340 = vmatprep.subr.mxu0 0.0
        %341 = vmatpush1.msra.mxu0 %v302
        %342 = vmatprep.subr.mxu0 0.0
        %343 = vmatpush1.msra.mxu0 %v303
        %344 = vmatprep.subr.mxu0 0.0
        %345 = vmatpush1.msra.mxu0 %v304
        %346 = vmatprep.subr.mxu0 0.0
        %347 = vmatpush1.msra.mxu0 %v305
        %348 = vmatprep.subr.mxu0 0.0
        %349 = vmatpush1.msra.mxu0 %v306
        %350 = vmatprep.subr.mxu0 0.0
        %351 = vmatpush1.msra.mxu0 %v307
        %352 = vmatprep.subr.mxu0 0.0
        %353 = vmatpush1.msra.mxu0 %v308
        %354 = vmatprep.subr.mxu0 0.0
        %355 = vmatpush1.msra.mxu0 %v309
        %356 = vmatprep.subr.mxu0 0.0
        %357 = vmatpush1.msra.mxu0 %v310
        %358 = vmatprep.subr.mxu0 0.0
        %359 = vmatpush1.msra.mxu0 %v311
        %360 = vmatprep.subr.mxu0 0.0
        %361 = vmatpush1.msra.mxu0 %v312
        %362 = vmatprep.subr.mxu0 0.0
        %363 = vmatpush1.msra.mxu0 %v313
        %364 = vmatprep.subr.mxu0 0.0
        %365 = vmatpush1.msra.mxu0 %v314
        %366 = vmatprep.subr.mxu0 0.0
        %367 = vmatpush1.msra.mxu0 %v315
        %368 = vmatprep.subr.mxu0 0.0
        %369 = vmatpush1.msra.mxu0 %v316
        %370 = vmatprep.subr.mxu0 0.0
        %371 = vmatpush1.msra.mxu0 %v317
        %372 = vmatprep.subr.mxu0 0.0
        %373 = vmatpush1.msra.mxu0 %v318
        %374 = vmatprep.subr.mxu0 0.0
        %375 = vmatpush1.msra.mxu0 %v319
        %376 = vmatprep.subr.mxu0 0.0
        %377 = vmatpush1.msra.mxu0 0.0
        %378 = vmatprep.subr.mxu0 0.0
        %379 = vmatpush1.msra.mxu0 0.0
        %380 = vmatprep.subr.mxu0 0.0
        %381 = vmatpush1.msra.mxu0 0.0
        %382 = vmatprep.subr.mxu0 0.0
        %383 = vmatpush1.msra.mxu0 0.0
        %384 = vmatprep.subr.mxu0 0.0
        %385 = vmatpush1.msra.mxu0 0.0
        %386 = vmatprep.subr.mxu0 0.0
        %387 = vmatpush1.msra.mxu0 0.0
        %388 = vmatprep.subr.mxu0 0.0
        %389 = vmatpush1.msra.mxu0 0.0
        %390 = vmatprep.subr.mxu0 0.0
        %391 = vmatpush1.msra.mxu0 0.0
        %392 = vmatprep.mubr.f32.mxu0 %v323
        %393 = vmatmul.mubr.f32.gmra.mrb[0].mxu0 %v292
        %v394 = vpop.f32.mrb[0].mxu0
        %v395 = vadd.f32 %v320, %v394
        %v396 = vpop.f32.mrb[0].mxu0
        %397 = vmatprep.mubr.f32.mxu0 %v326
        %398 = vmatmul.mubr.f32.gmra.mrb[0].mxu0 %v294
        %v399 = vpop.f32.mrb[0].mxu0
        %v400 = vadd.f32 %v320, %v399
        %v401 = vpop.f32.mrb[0].mxu0
        %402 = vdwg.mxu0
        %v403 = vmax.f32 %v395, 0.0
        %v404 = vmax.f32 %v400, 0.0
        %v405 = vstv %s261
        %v406 = vadd.f32 %v403, %v405
        %v407 = vadd.f32 %v404, %v405
        %410 = vrot.lane.b32.xlu0 %v406, 32
        %v411 = vpop.permute.xlu0 %410
        %412 = vrot.lane.b32.xlu0 %v407, 32
        %v413 = vpop.permute.xlu0 %412
        %416 = vst.msk [vmem:[#allocation3] sm:$0xff] %vm287, %v411
        %417 = vst.msk [vmem:[#allocation3 + $0x8] sm:$0xff] %vm264, %v411
        %418 = vst.msk [vmem:[#allocation3 + $0x10] sm:$0xff] %vm287, %v413
        %419 = vst.msk [vmem:[#allocation3 + $0x18] sm:$0xff] %vm264, %v413
        %v420 = vld [vmem:[#allocation3] sm:$0xff]
        %v421 = vld [vmem:[#allocation3 + $0x8] sm:$0xff]
        %v422 = vld [vmem:[#allocation3 + $0x10] sm:$0xff]
        %v423 = vld [vmem:[#allocation3 + $0x18] sm:$0xff]
        %v424 = vld [vmem:[#allocation11] sm:$0xff]
        %v425 = vld [vmem:[#allocation11 + $0x8] sm:$0xff]
        %v426 = vld [vmem:[#allocation11 + $0x10] sm:$0xff]
        %v427 = vld [vmem:[#allocation11 + $0x18] sm:$0xff]
        %v428 = vld [vmem:[#allocation11 + $0x20] sm:$0xff]
        %v429 = vld [vmem:[#allocation11 + $0x28] sm:$0xff]
        %v430 = vld [vmem:[#allocation11 + $0x30] sm:$0xff]
        %v431 = vld [vmem:[#allocation11 + $0x38] sm:$0xff]
        %v432 = vld [vmem:[#allocation11 + $0x40] sm:$0xff]
        %v433 = vld [vmem:[#allocation11 + $0x48] sm:$0xff]
        %v434 = vld [vmem:[#allocation11 + $0x50] sm:$0xff]
        %v435 = vld [vmem:[#allocation11 + $0x58] sm:$0xff]
        %v436 = vld [vmem:[#allocation11 + $0x60] sm:$0xff]
        %v437 = vld [vmem:[#allocation11 + $0x68] sm:$0xff]
        %v438 = vld [vmem:[#allocation11 + $0x70] sm:$0xff]
        %v439 = vld [vmem:[#allocation11 + $0x78] sm:$0xff]
        %v440 = vld [vmem:[#allocation11 + $0x80] sm:$0xff]
        %v441 = vld [vmem:[#allocation11 + $0x88] sm:$0xff]
        %v442 = vld [vmem:[#allocation11 + $0x90] sm:$0xff]
        %v443 = vld [vmem:[#allocation11 + $0x98] sm:$0xff]
        %v444 = vld [vmem:[#allocation11 + $0xa0] sm:$0xff]
        %v445 = vld [vmem:[#allocation11 + $0xa8] sm:$0xff]
        %v446 = vld [vmem:[#allocation11 + $0xb0] sm:$0xff]
        %v447 = vld [vmem:[#allocation11 + $0xb8] sm:$0xff]
        %v449 = vsel %vm321, %v421, 0
        %v452 = vsel %vm321, %v423, 0
        %454 = vmatprep.subr.mxu0 0.0
        %455 = vmatpush1.msra.mxu0 %v424
        %456 = vmatprep.subr.mxu0 0.0
        %457 = vmatpush1.msra.mxu0 %v425
        %458 = vmatprep.subr.mxu0 0.0
        %459 = vmatpush1.msra.mxu0 %v426
        %460 = vmatprep.subr.mxu0 0.0
        %461 = vmatpush1.msra.mxu0 %v427
        %462 = vmatprep.subr.mxu0 0.0
        %463 = vmatpush1.msra.mxu0 %v428
        %464 = vmatprep.subr.mxu0 0.0
        %465 = vmatpush1.msra.mxu0 %v429
        %466 = vmatprep.subr.mxu0 0.0
        %467 = vmatpush1.msra.mxu0 %v430
        %468 = vmatprep.subr.mxu0 0.0
        %469 = vmatpush1.msra.mxu0 %v431
        %470 = vmatprep.subr.mxu0 0.0
        %471 = vmatpush1.msra.mxu0 %v432
        %472 = vmatprep.subr.mxu0 0.0
        %473 = vmatpush1.msra.mxu0 %v433
        %474 = vmatprep.subr.mxu0 0.0
        %475 = vmatpush1.msra.mxu0 %v434
        %476 = vmatprep.subr.mxu0 0.0
        %477 = vmatpush1.msra.mxu0 %v435
        %478 = vmatprep.subr.mxu0 0.0
        %479 = vmatpush1.msra.mxu0 %v436
        %480 = vmatprep.subr.mxu0 0.0
        %481 = vmatpush1.msra.mxu0 %v437
        %482 = vmatprep.subr.mxu0 0.0
        %483 = vmatpush1.msra.mxu0 %v438
        %484 = vmatprep.subr.mxu0 0.0
        %485 = vmatpush1.msra.mxu0 %v439
        %486 = vmatprep.subr.mxu0 0.0
        %487 = vmatpush1.msra.mxu0 %v440
        %488 = vmatprep.subr.mxu0 0.0
        %489 = vmatpush1.msra.mxu0 %v441
        %490 = vmatprep.subr.mxu0 0.0
        %491 = vmatpush1.msra.mxu0 %v442
        %492 = vmatprep.subr.mxu0 0.0
        %493 = vmatpush1.msra.mxu0 %v443
        %494 = vmatprep.subr.mxu0 0.0
        %495 = vmatpush1.msra.mxu0 %v444
        %496 = vmatprep.subr.mxu0 0.0
        %497 = vmatpush1.msra.mxu0 %v445
        %498 = vmatprep.subr.mxu0 0.0
        %499 = vmatpush1.msra.mxu0 %v446
        %500 = vmatprep.subr.mxu0 0.0
        %501 = vmatpush1.msra.mxu0 %v447
        %502 = vmatprep.subr.mxu0 0.0
        %503 = vmatpush1.msra.mxu0 0.0
        %504 = vmatprep.subr.mxu0 0.0
        %505 = vmatpush1.msra.mxu0 0.0
        %506 = vmatprep.subr.mxu0 0.0
        %507 = vmatpush1.msra.mxu0 0.0
        %508 = vmatprep.subr.mxu0 0.0
        %509 = vmatpush1.msra.mxu0 0.0
        %510 = vmatprep.subr.mxu0 0.0
        %511 = vmatpush1.msra.mxu0 0.0
        %512 = vmatprep.subr.mxu0 0.0
        %513 = vmatpush1.msra.mxu0 0.0
        %514 = vmatprep.subr.mxu0 0.0
        %515 = vmatpush1.msra.mxu0 0.0
        %516 = vmatprep.subr.mxu0 0.0
        %517 = vmatpush1.msra.mxu0 0.0
        %518 = vmatprep.mubr.f32.mxu0 %v449
        %519 = vmatmul.mubr.f32.gmra.mrb[0].mxu0 %v420
        %v520 = vpop.f32.mrb[0].mxu0
        %v521 = vadd.f32 0.0, %v520
        %v522 = vpop.f32.mrb[0].mxu0
        %523 = vmatprep.mubr.f32.mxu0 %v452
        %524 = vmatmul.mubr.f32.gmra.mrb[0].mxu0 %v422
        %v525 = vpop.f32.mrb[0].mxu0
        %v526 = vadd.f32 0.0, %v525
        %v527 = vpop.f32.mrb[0].mxu0
        %528 = vdwg.mxu0
        %v529 = vld [vmem:[%s223] sm:$0xff]
        %v530 = vld [vmem:[%s223 + $0x8] sm:$0xff]
        %v531 = vstv %s263
        %v532 = vmul.f32 %v521, %v531
        %v533 = vmul.f32 %v526, %v531
        %v534 = vstv %s262
        %v535 = vadd.f32 %v532, %v534
        %v536 = vadd.f32 %v533, %v534
        %v537 = vadd.f32 %v535, %v529
        %v538 = vadd.f32 %v536, %v530
        %v539 = vmax.f32 %v537, 0.0
        %v540 = vmax.f32 %v538, 0.0
        %541 = vst [vmem:[%s256] sm:$0xff] %v539
        %542 = vst [vmem:[%s256 + $0x8] sm:$0xff] %v540
        %s543 = sand.u32 %s120, 1
        %s544 = scalar_lea.sflag [#allocation6], %s543
        %s545 = sand.u32 %s120, 1
        %s546 = smul.addr %s545, 16
        %s547 = scalar_lea.vmem [#allocation12], %s546
        // Predicated region
        $region53: #{tpu_custom_call.1} parent=35 // pred_check
          %p548 = pneg %p130
        $region54: #{tpu_custom_call.1} parent=35 // pred_check_branch
          %550 = sbr.rel (%p548) target = $region56
        $region55: #{tpu_custom_call.1} parent=35 // pred_region
          %s551 = smul.u32 2, %s23
          %s553 = ssub.s32 256, 256
          %554 = vsyncadd %s544, %s553
          %s555 = smul.addr %s551, 128
          %s556 = scalar_lea.hbm %s4, %s555
          %s557 = sshll.u32 %s547, 4
          %s558 = int_to_ptr.vmem [resolvable:$true] %s557
          %563 = dma.vmem_to_hbm [thread:$0]  %s558, 256, %s556, %s544, 128, 128, 8
        $region56: #{tpu_custom_call.1} parent=35 // pred_fallthru
          _
      $region36: #{tpu_custom_call.1} parent=5 // pred_fallthru
        _
      %p564 = scmp.le.s32.totalorder 2, %s18
      // Predicated region
      $region57: #{tpu_custom_call.1} parent=5 // pred_check
        %p565 = pneg %p564
      $region58: #{tpu_custom_call.1} parent=5 // pred_check_branch
        %567 = sbr.rel (%p565) target = $region60
      $region59: #{tpu_custom_call.1} parent=5 // pred_region
        %s568 = ssub.s32 %s18, 2
        // Predicated region
        $region61: #{tpu_custom_call.1} parent=59 // pred_check
          %p569 = pneg %p136
        $region62: #{tpu_custom_call.1} parent=59 // pred_check_branch
          %571 = sbr.rel (%p569) target = $region64
        $region63: #{tpu_custom_call.1} parent=59 // pred_region
          %s572 = sand.u32 %s121, 1
          %s573 = scalar_lea.sflag [#allocation6], %s572
          %s574 = sand.u32 %s121, 1
          %s575 = smul.addr %s574, 16
          %s576 = scalar_lea.vmem [#allocation12], %s575
          %577 = dma.done %s573, 256
        $region64: #{tpu_custom_call.1} parent=59 // pred_fallthru
          _
      $region60: #{tpu_custom_call.1} parent=5 // pred_fallthru
        _
    $region6: #{tpu_custom_call.1} parent=1 // loop_footer
      %s22 = sadd.s32 1, %s18
    $region7: #{tpu_custom_call.1} parent=1 // loop_footer_branch
      %17 = sbr.rel target = $region3
    $region8: #{tpu_custom_call.1} parent=1 // loop_exit
      _
    %578 = vsyncpa [#allocation5], 1
    %s579 = scalar_lea.sflag [#allocation5], 1
    %580 = vsyncpa %s579, 1
    %581 = vsyncpa [#allocation10], 1
    %582 = vsyncpa [#allocation6], 1
    %s583 = scalar_lea.sflag [#allocation6], 1
    %584 = vsyncpa %s583, 1
    %585 = vsyncpa [#allocation7], 1
    %s586 = scalar_lea.sflag [#allocation7], 1
    %587 = vsyncpa %s586, 1

</llo_original>
